<compile_context>
chip_gen: v7x
topology: tpu7x:2x2x1
jax: 0.10.0
libtpu: 0.0.40
codegen_flags: <defaults>
</compile_context>

<pallas_src>
import functools
import math

import jax
import jax.numpy as jnp
from jax.experimental import pallas as pl
from jax.experimental.pallas import tpu as pltpu

_TWO_PI = 6.283185307179586


def _pou_sin_kernel(x_ref, o_ref, *, d, k):
    """x_ref: (d*k, TN) block -> o_ref: (k, TN) block.

    Row f*k + g of the input holds feature f of batch-chunk g.
    """
    x = x_ref[...].astype(jnp.float32)
    c = jnp.clip(jnp.abs(x), 0.75, 1.25)
    t = _TWO_PI * (c - 1.0)                 # t in [-pi/2, pi/2]
    t2 = t * t
    # odd Taylor polynomial for sin(t) on [-pi/2, pi/2]; error <= ~6e-8
    p = jnp.float32(-1.0 / 39916800.0)
    p = p * t2 + jnp.float32(1.0 / 362880.0)
    p = p * t2 + jnp.float32(-1.0 / 5040.0)
    p = p * t2 + jnp.float32(1.0 / 120.0)
    p = p * t2 + jnp.float32(-1.0 / 6.0)
    p = p * t2 + jnp.float32(1.0)
    s = t * p                               # ~= sin(t)
    psi = 0.5 - 0.5 * s                     # (d*k, TN), values in [0, 1]

    if k == 1:
        # generic path: product over the feature (sublane) axis
        o_ref[...] = jnp.prod(psi, axis=0, keepdims=True)
    else:
        # packed small-d path: multiply the d feature slabs of k sublanes each
        acc = psi[0:k]
        for f in range(1, d):
            acc = acc * psi[f * k:(f + 1) * k]
        o_ref[...] = acc


def _round_up(x, m):
    return ((x + m - 1) // m) * m


@functools.partial(jax.jit, static_argnames=("keepdim", "max_tile_n"))
def pou_sin(x, keepdim: bool = False, max_tile_n: int = 32768):
    """x: (..., d) float array -> (...,) or (..., 1), values in [0, 1]."""
    orig_dtype = x.dtype
    batch_shape = x.shape[:-1]
    d = x.shape[-1]
    n = math.prod(batch_shape)

    out_shape = batch_shape + ((1,) if keepdim else ())
    if n == 0:
        return jnp.zeros(out_shape, orig_dtype)
    if d == 0:
        return jnp.ones(out_shape, orig_dtype)   # empty product

    # Keep bf16 inputs in bf16 for the HBM->VMEM DMA; upcast inside the kernel.
    if x.dtype.name not in ("float32", "bfloat16"):
        x = x.astype(jnp.float32)
    itemsize = x.dtype.itemsize

    # Pack k batch chunks along the sublane axis so small d still fills vregs.
    k = max(1, 8 // d)

    # Tile-size selection: as large as possible, capped so double-buffered
    # input + output blocks stay well under the 32 MiB scoped-VMEM default.
    vmem_budget = 20 * 1024 * 1024
    bytes_per_lane = 2 * (d * k * itemsize + k * 4)     # 2x in + 2x out buffers
    cap = max(128, (vmem_budget // bytes_per_lane) // 128 * 128)
    m_min = _round_up(-(-n // k), 128)                  # cdiv(n, k), lane-aligned
    tile_n = max(128, min(max(128, max_tile_n // 128 * 128), cap, m_min))
    m = _round_up(-(-n // k), tile_n)
    n_pad = k * m

    # Host-side relayout (single fused XLA pad+transpose pass over HBM):
    #   (n, d) row-major -> (d*k, m), row f*k + g = feature f of batch chunk g.
    # Callers that already hold a feature-major (d, N) layout could skip this.
    xf = x.reshape(n, d)
    if n_pad != n:
        xf = jnp.pad(xf, ((0, n_pad - n), (0, 0)))      # pad rows discarded below
    xt = jnp.transpose(xf.reshape(k, m, d), (2, 0, 1)).reshape(d * k, m)

    out = pl.pallas_call(
        functools.partial(_pou_sin_kernel, d=d, k=k),
        out_shape=jax.ShapeDtypeStruct((k, m), jnp.float32),
        grid_spec=pltpu.PrefetchScalarGridSpec(
            num_scalar_prefetch=0,
            grid=(m // tile_n,),
            in_specs=[pl.BlockSpec((d * k, tile_n), lambda i: (0, i))],
            out_specs=pl.BlockSpec((k, tile_n), lambda i: (0, i)),
        ),
        compiler_params=pltpu.CompilerParams(
            dimension_semantics=("parallel",),
        ),
    )(xt)

    # (k, m) row-major flatten restores the original batch order.
    res = out.reshape(-1)[:n].reshape(batch_shape).astype(orig_dtype)
    if keepdim:
        res = res[..., None]
    return res


def _pou_sin_ref(x, keepdim=False):
    x = x.astype(jnp.float32)
    f1 = jnp.logical_and(x >= -1.25, x < -0.75)
    f2 = jnp.logical_and(x >= -0.75, x < 0.75)
    f3 = jnp.logical_and(x >= 0.75, x < 1.25)
    s = jnp.sin(2.0 * jnp.pi * x)
    l1 = 0.5 * (1.0 + s) * f1.astype(x.dtype)
    l2 = f2.astype(x.dtype)
    l3 = 0.5 * (1.0 - s) * f3.astype(x.dtype)
    ret = l1 + l2 + l3
    return jnp.prod(ret, axis=-1, keepdims=keepdim)


if __name__ == "__main__":
    key = jax.random.PRNGKey(0)
    k1, k2 = jax.random.split(key)

    # d = 2: packed sublane path (k = 4)
    x = jax.random.uniform(k1, (4, 64, 2), dtype=jnp.float32,
                           minval=-1.5, maxval=1.5)
    y = jax.block_until_ready(pou_sin(x, keepdim=False))
    y_keep = jax.block_until_ready(pou_sin(x, keepdim=True))
    ref = _pou_sin_ref(x, keepdim=False)
    ref_keep = _pou_sin_ref(x, keepdim=True)
    assert y.shape == (4, 64), y.shape
    assert y_keep.shape == (4, 64, 1), y_keep.shape
    assert jnp.allclose(y, ref, atol=1e-5, rtol=1e-5)
    assert jnp.allclose(y_keep, ref_keep, atol=1e-5, rtol=1e-5)

    # d = 5: generic (k = 1) path
    x2 = jax.random.uniform(k2, (3, 200, 5), dtype=jnp.float32,
                            minval=-2.0, maxval=2.0)
    y2 = jax.block_until_ready(pou_sin(x2))
    assert y2.shape == (3, 200), y2.shape
    assert jnp.allclose(y2, _pou_sin_ref(x2), atol=1e-5, rtol=1e-5)

    # force a multi-tile grid to exercise the pipelined path
    y3 = jax.block_until_ready(pou_sin(x2, max_tile_n=128))
    assert jnp.allclose(y3, _pou_sin_ref(x2), atol=1e-5, rtol=1e-5)

    print("KERNEL_OK")
</pallas_src>

<mosaic_0001>
module attributes {stable_mosaic.version = 11 : i64} {
  func.func @_pou_sin_kernel(%arg0: i32, %arg1: memref<8x128xf32, #tpu.memory_space<vmem>>, %arg2: memref<4x128xf32, #tpu.memory_space<vmem>>) attributes {dimension_semantics = [#tpu.dimension_semantics<parallel>], iteration_bounds = array<i64: 1>, scalar_prefetch = 0 : i64, scratch_operands = 0 : i64, tpu.core_type = #tpu.core_type<tc>, window_params = [{transform_indices = @transform_0, window_bounds = array<i64: 8, 128>}, {transform_indices = @transform_1, window_bounds = array<i64: 4, 128>}]} {
    %c0 = arith.constant 0 : index
    %c0_0 = arith.constant 0 : index
    %0 = vector.load %arg1[%c0, %c0_0] : memref<8x128xf32, #tpu.memory_space<vmem>>, vector<8x128xf32>
    %1 = math.absf %0 : vector<8x128xf32>
    %cst = arith.constant 7.500000e-01 : f32
    %cst_1 = arith.constant 1.250000e+00 : f32
    %2 = vector.broadcast %cst : f32 to vector<8x128xf32>
    %3 = arith.maximumf %2, %1 : vector<8x128xf32>
    %4 = vector.broadcast %cst_1 : f32 to vector<8x128xf32>
    %5 = arith.minimumf %4, %3 : vector<8x128xf32>
    %cst_2 = arith.constant 1.000000e+00 : f32
    %6 = vector.broadcast %cst_2 : f32 to vector<8x128xf32>
    %7 = arith.subf %5, %6 : vector<8x128xf32>
    %cst_3 = arith.constant 6.28318548 : f32
    %8 = vector.broadcast %cst_3 : f32 to vector<8x128xf32>
    %9 = arith.mulf %8, %7 : vector<8x128xf32>
    %10 = arith.mulf %9, %9 : vector<8x128xf32>
    %cst_4 = arith.constant -2.50521079E-8 : f32
    %11 = vector.broadcast %cst_4 : f32 to vector<8x128xf32>
    %12 = arith.mulf %11, %10 : vector<8x128xf32>
    %cst_5 = arith.constant 2.75573188E-6 : f32
    %13 = vector.broadcast %cst_5 : f32 to vector<8x128xf32>
    %14 = arith.addf %12, %13 : vector<8x128xf32>
    %15 = arith.mulf %14, %10 : vector<8x128xf32>
    %cst_6 = arith.constant -1.98412701E-4 : f32
    %16 = vector.broadcast %cst_6 : f32 to vector<8x128xf32>
    %17 = arith.addf %15, %16 : vector<8x128xf32>
    %18 = arith.mulf %17, %10 : vector<8x128xf32>
    %cst_7 = arith.constant 0.00833333377 : f32
    %19 = vector.broadcast %cst_7 : f32 to vector<8x128xf32>
    %20 = arith.addf %18, %19 : vector<8x128xf32>
    %21 = arith.mulf %20, %10 : vector<8x128xf32>
    %cst_8 = arith.constant -0.166666672 : f32
    %22 = vector.broadcast %cst_8 : f32 to vector<8x128xf32>
    %23 = arith.addf %21, %22 : vector<8x128xf32>
    %24 = arith.mulf %23, %10 : vector<8x128xf32>
    %cst_9 = arith.constant 1.000000e+00 : f32
    %25 = vector.broadcast %cst_9 : f32 to vector<8x128xf32>
    %26 = arith.addf %24, %25 : vector<8x128xf32>
    %27 = arith.mulf %9, %26 : vector<8x128xf32>
    %cst_10 = arith.constant 5.000000e-01 : f32
    %28 = vector.broadcast %cst_10 : f32 to vector<8x128xf32>
    %29 = arith.mulf %28, %27 : vector<8x128xf32>
    %cst_11 = arith.constant 5.000000e-01 : f32
    %30 = vector.broadcast %cst_11 : f32 to vector<8x128xf32>
    %31 = arith.subf %30, %29 : vector<8x128xf32>
    %32 = vector.extract_strided_slice %31 {offsets = [0, 0], sizes = [4, 128], strides = [1, 1]} : vector<8x128xf32> to vector<4x128xf32>
    %33 = vector.extract_strided_slice %31 {offsets = [4, 0], sizes = [4, 128], strides = [1, 1]} : vector<8x128xf32> to vector<4x128xf32>
    %34 = arith.mulf %32, %33 : vector<4x128xf32>
    %c0_12 = arith.constant 0 : index
    %c0_13 = arith.constant 0 : index
    %35 = vector.load %arg2[%c0_12, %c0_13] : memref<4x128xf32, #tpu.memory_space<vmem>>, vector<4x128xf32>
    tpu.vector_store %arg2[%c0_12, %c0_13], %34 {strides = array<i32>} : memref<4x128xf32, #tpu.memory_space<vmem>>, vector<4x128xf32>,
    return
  }
  func.func @transform_0(%arg0: i32) -> (i32, i32) {
    %c0_i32 = arith.constant 0 : i32
    %c0_i32_0 = arith.constant 0 : i32
    return %c0_i32, %arg0 : i32, i32
  }
  func.func @transform_1(%arg0: i32) -> (i32, i32) {
    %c0_i32 = arith.constant 0 : i32
    %c0_i32_0 = arith.constant 0 : i32
    return %c0_i32, %arg0 : i32, i32
  }
}

</mosaic_0001>

<llo_original>
// kernel: pou_sin.1
$region0: #{pou_sin.1}
  #allocation0 [shape = 'u32[]', space=smem, size = 0x4, offset = 0x4, fixed_abs, tag = 'smem constant byte address 0x4 - core index']
  #allocation1 [shape = 'u32[144,128]{1,0:T(1,128)}', space=vmem, size = 0x12000, scoped, tag = 'internal scratch']
  %s0 = inlined_call_operand.vmem [shape: f32[8,128], index: 0, kind: input, shape index: {}]
  %s1 = inlined_call_operand.vmem [shape: f32[4,128], index: 1, kind: output, shape index: {}]
  %s2 = sld [smem:[#allocation0]]
  $region14: #{pou_sin.1} parent=0
    _
  %s4 = ssub.s32 1, %s2
  %s5 = scalar_select 0, %s4, %s2
  // Predicated region
  $region2: #{pou_sin.1} parent=0 // pred_check
    _
  $region3: #{pou_sin.1} parent=0 // pred_check_branch
    %7 = sbr.rel (0) target = $region5
  $region4: #{pou_sin.1} parent=0 // pred_region
    _
  $region5: #{pou_sin.1} parent=0 // pred_fallthru
    _
  %v8 = vld [vmem:[%s0] sm:$0xff]
  %v9 = vand.u32 2147483647, %v8
  %v10 = vmax.f32 %v9, 0.75
  %v11 = vmin.f32 %v10, 1.25
  %v12 = vsub.f32 %v11, 1.0
  %v13 = vmul.f32 %v12, 6.2831855
  %v14 = vmul.f32 %v13, %v13
  %v15 = vmul.f32 %v14, -2.5052108e-08
  %v16 = vadd.f32 %v15, 2.7557319e-06
  %v17 = vmul.f32 %v16, %v14
  %v18 = vadd.f32 %v17, -0.0001984127
  %v19 = vmul.f32 %v18, %v14
  %v20 = vadd.f32 %v19, 0.008333334
  %v21 = vmul.f32 %v20, %v14
  %v22 = vadd.f32 %v21, -0.16666667
  %v23 = vmul.f32 %v22, %v14
  %v24 = vadd.f32 %v23, 1.0
  %v25 = vmul.f32 %v13, %v24
  %v26 = vmul.f32 %v25, 0.5
  %v27 = vsub.f32 0.5, %v26
  %v29 = vrot.slane %v27, 4
  %v31 = vmul.f32 %v27, %v29
  %32 = vst [vmem:[%s1] sm:$0xf] %v31
  // Predicated region
  $region6: #{pou_sin.1} parent=0 // pred_check
    _
  $region7: #{pou_sin.1} parent=0 // pred_check_branch
    %34 = sbr.rel (0) target = $region9
  $region8: #{pou_sin.1} parent=0 // pred_region
    _
  $region9: #{pou_sin.1} parent=0 // pred_fallthru
    _
  // Predicated region
  $region10: #{pou_sin.1} parent=0 // pred_check
    _
  $region11: #{pou_sin.1} parent=0 // pred_check_branch
    %36 = sbr.rel (0) target = $region13
  $region12: #{pou_sin.1} parent=0 // pred_region
    _
  $region13: #{pou_sin.1} parent=0 // pred_fallthru
    _

</llo_original>
